<compile_context>
chip_gen: v5e
topology: v5e:2x2
jax: 0.10.0
libtpu: 0.0.40
codegen_flags: <defaults>
</compile_context>

<pallas_src>
import jax
import jax.numpy as jnp
from jax.experimental import pallas as pl
from jax.experimental.pallas import tpu as pltpu

BN_EPS = 0.001


# -----------------------------------------------------------------------------
# Kernels
# -----------------------------------------------------------------------------
def conv_matmul_stats_kernel(p_ref, w_ref, y_ref, sum_ref, sq_ref, acc_ref):
    """Tiled bf16 matmul with f32 accumulator; emits per-tile channel moments."""
    k = pl.program_id(2)

    @pl.when(k == 0)
    def _init():
        acc_ref[...] = jnp.zeros_like(acc_ref)

    acc_ref[...] += jnp.dot(p_ref[...], w_ref[...],
                            preferred_element_type=jnp.float32)

    @pl.when(k == pl.num_programs(2) - 1)
    def _finalize():
        y = acc_ref[...]                              # f32 accumulator
        y_ref[...] = y.astype(y_ref.dtype)            # bf16 writeback
        # Single-pass moments for BatchNorm: per-channel sum and sum(x^2) of
        # this (TM, TN) tile, taken from the f32 accumulator.  Replicated
        # across 8 sublanes so the stats block keeps an (8, 128) layout.
        s = jnp.sum(y, axis=0, keepdims=True)
        ss = jnp.sum(y * y, axis=0, keepdims=True)
        sum_ref[...] = jnp.broadcast_to(s, sum_ref.shape)
        sq_ref[...] = jnp.broadcast_to(ss, sq_ref.shape)


def bn_relu_kernel(y_ref, ss_ref, o_ref):
    """Fused affine BatchNorm (precomputed scale/shift) + ReLU."""
    scale = ss_ref[0:1, :]                            # (1, C) f32, resident
    shift = ss_ref[1:2, :]
    z = y_ref[...].astype(jnp.float32) * scale + shift
    o_ref[...] = jnp.maximum(z, 0.0).astype(o_ref.dtype)


# -----------------------------------------------------------------------------
# Host-side glue
# -----------------------------------------------------------------------------
def _round_up(x, m):
    return (x + m - 1) // m * m


def _vmem_budget_bytes():
    """Generation-aware VMEM budget (v5e/v6e ~90 MiB, v7x ~44 MiB)."""
    cap = None
    try:
        cap = getattr(pltpu.get_tpu_info(), "vmem_capacity_bytes", None)
    except Exception:
        cap = None
    if not cap:
        return 32 * 1024 * 1024          # conservative fallback
    return int(min(cap * 7 // 10, 96 * 1024 * 1024))


def _largest_dividing_tile(dim_128, candidates=(512, 256, 128)):
    """Largest candidate that divides dim_128 (dim_128 is a 128-multiple)."""
    for c in candidates:
        if dim_128 % c == 0:
            return c
    return 128


def _pass2_rows(m_pad, c_pad, budget):
    """Rows per pass-2 block: big, lane-dense, VMEM-bounded, divides m_pad."""
    # per step: y bf16 + out f32, double-buffered  ->  ~12 bytes/elem; use 16.
    max_rows = max(128, budget // (16 * c_pad))
    want_two = m_pad >= 256                 # keep >=2 blocks for megacore
    for cand in (m_pad, 4096, 2048, 1024, 512, 256, 128):
        if cand > m_pad or m_pad % cand:
            continue
        if cand > max_rows:
            continue
        if want_two and cand > m_pad // 2:
            continue
        return cand
    return 128


def _fixed_padding_nhwc(x, kernel_size, rate):
    """Same semantics as the PyTorch fixed_padding (asymmetric SAME pad)."""
    keff = kernel_size + (kernel_size - 1) * (rate - 1)
    pad_total = keff - 1
    pad_beg = pad_total // 2
    pad_end = pad_total - pad_beg
    return jnp.pad(x, ((0, 0), (pad_beg, pad_end), (pad_beg, pad_end), (0, 0)))


def _extract_patches(x_nhwc, kernel_size, stride, rate):
    """im2col glue (pure data movement); input is already bf16."""
    n, h, w, c = x_nhwc.shape
    h_out = (h - (kernel_size - 1) * rate - 1) // stride + 1
    w_out = (w - (kernel_size - 1) * rate - 1) // stride + 1
    cols = []
    for kh in range(kernel_size):
        for kw in range(kernel_size):
            sl = jax.lax.slice(
                x_nhwc,
                (0, kh * rate, kw * rate, 0),
                (n,
                 kh * rate + (h_out - 1) * stride + 1,
                 kw * rate + (w_out - 1) * stride + 1,
                 c),
                (1, stride, stride, 1))
            cols.append(sl)
    patches = jnp.concatenate(cols, axis=-1)          # (N, Hout, Wout, kH*kW*C)
    return (patches.reshape(n * h_out * w_out, kernel_size * kernel_size * c),
            (n, h_out, w_out))


class Conv2dSame:
    """Strided 2-D conv with 'SAME' padding + BatchNorm + ReLU (Pallas forward)."""

    def __init__(self, in_channels, out_channels, kernel_size, stride, rate=1, *, key):
        self._kernel_size = kernel_size
        self._stride = stride
        self._rate = rate
        self._without_padding = stride == 1
        k_w, k_g, k_b = jax.random.split(key, 3)
        # PyTorch Conv2d default init == U(-1/sqrt(fan_in), 1/sqrt(fan_in)).
        fan_in = in_channels * kernel_size * kernel_size
        bound = 1.0 / (fan_in ** 0.5)
        self.weight = jax.random.uniform(
            k_w, (out_channels, in_channels, kernel_size, kernel_size),
            jnp.float32, -bound, bound)                       # OIHW, like PyTorch
        # BN affine params (deterministic, non-trivial values).
        self.gamma = jax.random.uniform(k_g, (out_channels,), jnp.float32, 0.5, 1.5)
        self.beta = jax.random.uniform(k_b, (out_channels,), jnp.float32, -0.5, 0.5)

    def __call__(self, x_nchw):
        x = jnp.transpose(x_nchw, (0, 2, 3, 1)).astype(jnp.bfloat16)  # NCHW->NHWC
        if self._without_padding:
            pad = (self._kernel_size - 1) * self._rate // 2
            x = jnp.pad(x, ((0, 0), (pad, pad), (pad, pad), (0, 0)))
        else:
            x = _fixed_padding_nhwc(x, self._kernel_size, self._rate)

        patches, (n, h_out, w_out) = _extract_patches(
            x, self._kernel_size, self._stride, self._rate)
        m_true, p_true = patches.shape
        c_out = self.weight.shape[0]
        vmem_budget = _vmem_budget_bytes()

        # --- tile selection (lane dims padded to 128-multiples, tiles large) ---
        m_128 = _round_up(m_true, 128)
        p_pad = _round_up(p_true, 128)
        c_pad = _round_up(c_out, 128)
        tk = _largest_dividing_tile(p_pad)
        tn = _largest_dividing_tile(c_pad)
        tm = next(c for c in (1024, 512, 256, 128) if c <= m_128)
        m_pad = _round_up(m_true, tm)
        # Guarantee >=2 parallel (M,N) tiles when the problem allows it (v7x
        # has 2 TensorCores sharded over the parallel grid axes).
        if tm >= 256 and (m_pad // tm) * (c_pad // tn) < 2:
            tm //= 2
            m_pad = _round_up(m_true, tm)
        num_m, num_n, num_k = m_pad // tm, c_pad // tn, p_pad // tk

        patches_b = jnp.pad(patches, ((0, m_pad - m_true), (0, p_pad - p_true)))
        # OIHW -> (kH, kW, I, O) -> (kH*kW*I, O), matching patch column order.
        w_mat = jnp.transpose(self.weight, (2, 3, 1, 0)).reshape(-1, c_out)
        w_b = jnp.pad(w_mat, ((0, p_pad - p_true), (0, c_pad - c_out))
                      ).astype(jnp.bfloat16)
        gamma_p = jnp.pad(self.gamma, (0, c_pad - c_out))
        beta_p = jnp.pad(self.beta, (0, c_pad - c_out))

        # --- pass 1: tiled conv matmul + single-pass per-channel moments ------
        y, psum, psq = pl.pallas_call(
            conv_matmul_stats_kernel,
            out_shape=(
                jax.ShapeDtypeStruct((m_pad, c_pad), jnp.bfloat16),   # y in bf16
                jax.ShapeDtypeStruct((num_m * 8, c_pad), jnp.float32),
                jax.ShapeDtypeStruct((num_m * 8, c_pad), jnp.float32),
            ),
            grid=(num_m, num_n, num_k),
            in_specs=[
                pl.BlockSpec((tm, tk), lambda i, j, k: (i, k)),
                pl.BlockSpec((tk, tn), lambda i, j, k: (k, j)),
            ],
            out_specs=(
                pl.BlockSpec((tm, tn), lambda i, j, k: (i, j)),
                pl.BlockSpec((8, tn), lambda i, j, k: (i, j)),
                pl.BlockSpec((8, tn), lambda i, j, k: (i, j)),
            ),
            scratch_shapes=[pltpu.VMEM((tm, tn), jnp.float32)],
            compiler_params=pltpu.CompilerParams(
                dimension_semantics=("parallel", "parallel", "arbitrary"),
                vmem_limit_bytes=vmem_budget),
        )(patches_b, w_b)

        # --- tiny global reduction -> per-channel scale / shift (f32) ---------
        # Padded M rows are all-zero patches -> contribute 0 to both moments,
        # so dividing by the true M gives exact training-mode batch stats.
        total = jnp.sum(psum[0::8], axis=0)           # rows replicated per tile
        total_sq = jnp.sum(psq[0::8], axis=0)
        mean = total / m_true
        var = jnp.maximum(total_sq / m_true - mean * mean, 0.0)   # biased var
        inv = jax.lax.rsqrt(var + BN_EPS)
        scale = gamma_p * inv
        shift = beta_p - mean * scale
        scale_shift = jnp.stack([scale, shift], axis=0)           # (2, c_pad)

        # --- pass 2: fused BN affine + ReLU, big lane-dense blocks over M ------
        tm2 = _pass2_rows(m_pad, c_pad, vmem_budget)
        out = pl.pallas_call(
            bn_relu_kernel,
            out_shape=jax.ShapeDtypeStruct((m_pad, c_pad), jnp.float32),
            grid=(m_pad // tm2,),
            in_specs=[
                pl.BlockSpec((tm2, c_pad), lambda i: (i, 0)),
                pl.BlockSpec((2, c_pad), lambda i: (0, 0)),   # resident, one DMA
            ],
            out_specs=pl.BlockSpec((tm2, c_pad), lambda i: (i, 0)),
            compiler_params=pltpu.CompilerParams(
                dimension_semantics=("parallel",),
                vmem_limit_bytes=vmem_budget),
        )(y, scale_shift)

        out = out[:m_true, :c_out].reshape(n, h_out, w_out, c_out)
        return jnp.transpose(out, (0, 3, 1, 2))  # NHWC -> NCHW


if __name__ == "__main__":
    key = jax.random.PRNGKey(0)
    k_x, k_m = jax.random.split(key)
    # Small shapes consistent with the module's NCHW forward.
    x = jax.random.normal(k_x, (2, 4, 16, 16), jnp.float32)

    mod = Conv2dSame(in_channels=4, out_channels=8, kernel_size=3, stride=2,
                     rate=1, key=k_m)
    y = mod(x)
    jax.block_until_ready(y)

    assert y.shape == (2, 8, 8, 8), y.shape          # (N, C_out, H_out, W_out)
    assert bool(jnp.all(y >= 0.0))                   # ReLU output
    assert bool(jnp.all(jnp.isfinite(y)))
    print("KERNEL_OK")
</pallas_src>

<mosaic_0001>
module attributes {stable_mosaic.version = 11 : i64} {
  func.func @conv_matmul_stats_kernel(%arg0: i32, %arg1: i32, %arg2: i32, %arg3: memref<128x128xbf16, #tpu.memory_space<vmem>>, %arg4: memref<128x128xbf16, #tpu.memory_space<vmem>>, %arg5: memref<128x128xbf16, #tpu.memory_space<vmem>>, %arg6: memref<8x128xf32, #tpu.memory_space<vmem>>, %arg7: memref<8x128xf32, #tpu.memory_space<vmem>>, %arg8: memref<128x128xf32, #tpu.memory_space<vmem>>) attributes {dimension_semantics = [#tpu.dimension_semantics<parallel>, #tpu.dimension_semantics<parallel>, #tpu.dimension_semantics<arbitrary>], iteration_bounds = array<i64: 1, 1, 1>, scalar_prefetch = 0 : i64, scratch_operands = 1 : i64, tpu.core_type = #tpu.core_type<tc>, window_params = [{transform_indices = @transform_0, window_bounds = array<i64: 128, 128>}, {transform_indices = @transform_1, window_bounds = array<i64: 128, 128>}, {transform_indices = @transform_2, window_bounds = array<i64: 128, 128>}, {transform_indices = @transform_3, window_bounds = array<i64: 8, 128>}, {transform_indices = @transform_4, window_bounds = array<i64: 8, 128>}]} {
    %c0_i32 = arith.constant 0 : i32
    %0 = arith.cmpi eq, %arg2, %c0_i32 : i32
    %1 = arith.extui %0 : i1 to i32
    %c0_i32_0 = arith.constant 0 : i32
    %2 = arith.cmpi ne, %1, %c0_i32_0 : i32
    scf.if %2 {
      %cst_10 = arith.constant 0.000000e+00 : f32
      %12 = vector.broadcast %cst_10 : f32 to vector<128x128xf32>
      %c0_11 = arith.constant 0 : index
      %c0_12 = arith.constant 0 : index
      %13 = vector.load %arg8[%c0_11, %c0_12] : memref<128x128xf32, #tpu.memory_space<vmem>>, vector<128x128xf32>
      tpu.vector_store %arg8[%c0_11, %c0_12], %12 {strides = array<i32>} : memref<128x128xf32, #tpu.memory_space<vmem>>, vector<128x128xf32>,
    } else {
    }
    %c0 = arith.constant 0 : index
    %c0_1 = arith.constant 0 : index
    %3 = vector.load %arg8[%c0, %c0_1] : memref<128x128xf32, #tpu.memory_space<vmem>>, vector<128x128xf32>
    %c0_2 = arith.constant 0 : index
    %c0_3 = arith.constant 0 : index
    %4 = vector.load %arg3[%c0_2, %c0_3] : memref<128x128xbf16, #tpu.memory_space<vmem>>, vector<128x128xbf16>
    %c0_4 = arith.constant 0 : index
    %c0_5 = arith.constant 0 : index
    %5 = vector.load %arg4[%c0_4, %c0_5] : memref<128x128xbf16, #tpu.memory_space<vmem>>, vector<128x128xbf16>
    %cst = arith.constant dense<0.000000e+00> : vector<128x128xf32>
    %6 = tpu.matmul %4, %5, %cst {dimension_numbers = #tpu.dot_dimension_numbers<[1], [0], [0], [1], [0, 0, 1, 1], [], []>} : vector<128x128xbf16>, vector<128x128xbf16>, vector<128x128xf32> -> vector<128x128xf32>
    %7 = arith.addf %3, %6 : vector<128x128xf32>
    %c0_6 = arith.constant 0 : index
    %c0_7 = arith.constant 0 : index
    %8 = vector.load %arg8[%c0_6, %c0_7] : memref<128x128xf32, #tpu.memory_space<vmem>>, vector<128x128xf32>
    tpu.vector_store %arg8[%c0_6, %c0_7], %7 {strides = array<i32>} : memref<128x128xf32, #tpu.memory_space<vmem>>, vector<128x128xf32>,
    %c0_i32_8 = arith.constant 0 : i32
    %9 = arith.cmpi eq, %arg2, %c0_i32_8 : i32
    %10 = arith.extui %9 : i1 to i32
    %c0_i32_9 = arith.constant 0 : i32
    %11 = arith.cmpi ne, %10, %c0_i32_9 : i32
    scf.if %11 {
      %c0_10 = arith.constant 0 : index
      %c0_11 = arith.constant 0 : index
      %12 = vector.load %arg8[%c0_10, %c0_11] : memref<128x128xf32, #tpu.memory_space<vmem>>, vector<128x128xf32>
      %13 = arith.truncf %12 : vector<128x128xf32> to vector<128x128xbf16>
      %c0_12 = arith.constant 0 : index
      %c0_13 = arith.constant 0 : index
      %14 = vector.load %arg5[%c0_12, %c0_13] : memref<128x128xbf16, #tpu.memory_space<vmem>>, vector<128x128xbf16>
      tpu.vector_store %arg5[%c0_12, %c0_13], %13 {strides = array<i32>} : memref<128x128xbf16, #tpu.memory_space<vmem>>, vector<128x128xbf16>,
      %cst_14 = arith.constant dense<0.000000e+00> : vector<128xf32>
      %15 = vector.multi_reduction <add>, %12, %cst_14 [0] : vector<128x128xf32> to vector<128xf32>
      %16 = vector.shape_cast %15 : vector<128xf32> to vector<1x128xf32>
      %17 = arith.mulf %12, %12 : vector<128x128xf32>
      %cst_15 = arith.constant dense<0.000000e+00> : vector<128xf32>
      %18 = vector.multi_reduction <add>, %17, %cst_15 [0] : vector<128x128xf32> to vector<128xf32>
      %19 = vector.shape_cast %18 : vector<128xf32> to vector<1x128xf32>
      %20 = vector.shape_cast %16 : vector<1x128xf32> to vector<1x128xf32>
      %21 = vector.broadcast %20 : vector<1x128xf32> to vector<8x128xf32>
      %c0_16 = arith.constant 0 : index
      %c0_17 = arith.constant 0 : index
      %22 = vector.load %arg6[%c0_16, %c0_17] : memref<8x128xf32, #tpu.memory_space<vmem>>, vector<8x128xf32>
      tpu.vector_store %arg6[%c0_16, %c0_17], %21 {strides = array<i32>} : memref<8x128xf32, #tpu.memory_space<vmem>>, vector<8x128xf32>,
      %23 = vector.shape_cast %19 : vector<1x128xf32> to vector<1x128xf32>
      %24 = vector.broadcast %23 : vector<1x128xf32> to vector<8x128xf32>
      %c0_18 = arith.constant 0 : index
      %c0_19 = arith.constant 0 : index
      %25 = vector.load %arg7[%c0_18, %c0_19] : memref<8x128xf32, #tpu.memory_space<vmem>>, vector<8x128xf32>
      tpu.vector_store %arg7[%c0_18, %c0_19], %24 {strides = array<i32>} : memref<8x128xf32, #tpu.memory_space<vmem>>, vector<8x128xf32>,
    } else {
    }
    return
  }
  func.func @transform_0(%arg0: i32, %arg1: i32, %arg2: i32) -> (i32, i32) {
    %c0_i32 = arith.constant 0 : i32
    return %arg0, %arg2 : i32, i32
  }
  func.func @transform_1(%arg0: i32, %arg1: i32, %arg2: i32) -> (i32, i32) {
    %c0_i32 = arith.constant 0 : i32
    return %arg2, %arg1 : i32, i32
  }
  func.func @transform_2(%arg0: i32, %arg1: i32, %arg2: i32) -> (i32, i32) {
    %c0_i32 = arith.constant 0 : i32
    return %arg0, %arg1 : i32, i32
  }
  func.func @transform_3(%arg0: i32, %arg1: i32, %arg2: i32) -> (i32, i32) {
    %c0_i32 = arith.constant 0 : i32
    return %arg0, %arg1 : i32, i32
  }
  func.func @transform_4(%arg0: i32, %arg1: i32, %arg2: i32) -> (i32, i32) {
    %c0_i32 = arith.constant 0 : i32
    return %arg0, %arg1 : i32, i32
  }
}

</mosaic_0001>

<llo_original>
// kernel: tpu_custom_call.1
$region0: #{tpu_custom_call.1}
  #allocation0 [shape = 'u32[]', space=smem, size = 0x4, offset = 0x4, fixed_abs, tag = 'smem constant byte address 0x4 - core index']
  #allocation1 [shape = 'u32[72,128]{1,0:T(1,128)}', space=vmem, size = 0x9000, scoped, tag = 'internal scratch']
  #allocation2 [shape = 'f32[128,128]{1,0:T(8,128)}', space=vmem, size = 0x10000, scoped, tag = 'scratch operand']
  %s0 = inlined_call_operand.hbm [shape: bf16[128,128], index: 0, kind: input, shape index: {}]
  %s1 = inlined_call_operand.hbm [shape: bf16[128,128], index: 1, kind: input, shape index: {}]
  %s2 = inlined_call_operand.hbm [shape: bf16[128,128], index: 2, kind: output, shape index: {0}]
  %s3 = inlined_call_operand.hbm [shape: f32[8,128], index: 3, kind: output, shape index: {1}]
  %s4 = inlined_call_operand.hbm [shape: f32[8,128], index: 4, kind: output, shape index: {2}]
  %5 = xla_tuple %s2, %s3, %s4
  %s6 = sld [smem:[#allocation0]]
  $region50: #{tpu_custom_call.1} parent=0
    _
  %s8 = ssub.s32 1, %s6
  %s9 = scalar_select 0, %s8, %s6
  $region1: #{tpu_custom_call.1} parent=0
    #allocation3 [shape = 'u8[32768]{0}', space=vmem, size = 0x8000, scoped, tag = 'input window, operand 0, single buffered']
    #allocation4 [shape = 's32[1]{0}', space=sflag, size = 0x4, scoped, tag = 'scoped memory for tpu_custom_call.1']
    #allocation5 [shape = 's32[1]{0}', space=sflag, size = 0x4, scoped, tag = 'scoped memory for tpu_custom_call.1']
    #allocation6 [shape = 'u8[32768]{0}', space=vmem, size = 0x8000, scoped, tag = 'input window, operand 1, single buffered']
    #allocation7 [shape = 's32[1]{0}', space=sflag, size = 0x4, scoped, tag = 'scoped memory for tpu_custom_call.1']
    #allocation8 [shape = 'u8[32768]{0}', space=vmem, size = 0x8000, scoped, tag = 'output window, operand 0, single buffered']
    #allocation9 [shape = 'u8[4096]{0}', space=vmem, size = 0x1000, scoped, tag = 'output window, operand 1, single buffered']
    #allocation10 [shape = 's32[1]{0}', space=sflag, size = 0x4, scoped, tag = 'scoped memory for tpu_custom_call.1']
    #allocation11 [shape = 'u8[4096]{0}', space=vmem, size = 0x1000, scoped, tag = 'output window, operand 2, single buffered']
    %10 = vsyncpa [#allocation4], 0
    %11 = vsyncpa [#allocation7], 0
    %12 = vsyncpa [#allocation5], 0
    %13 = vsyncpa [#allocation10], 0
    // Predicated region
    $region2: #{tpu_custom_call.1} parent=1 // pred_check
      _
    $region3: #{tpu_custom_call.1} parent=1 // pred_check_branch
      %15 = sbr.rel (0) target = $region5
    $region4: #{tpu_custom_call.1} parent=1 // pred_region
      %17 = vsyncadd [#allocation4], 0
      %s18 = sshll.u32 %s0, 4
      %s19 = int_to_ptr.hbm [resolvable:$true] %s18
      %s20 = sshll.u32 [#allocation3], 4
      %s21 = int_to_ptr.vmem [resolvable:$true] %s20
      %26 = dma.hbm_to_vmem [thread:$0]  %s19, 1024, %s21, [#allocation4], 64, 64, 4
    $region5: #{tpu_custom_call.1} parent=1 // pred_fallthru
      _
    // Predicated region
    $region6: #{tpu_custom_call.1} parent=1 // pred_check
      _
    $region7: #{tpu_custom_call.1} parent=1 // pred_check_branch
      %28 = sbr.rel (0) target = $region9
    $region8: #{tpu_custom_call.1} parent=1 // pred_region
      %30 = vsyncadd [#allocation7], 0
      %s31 = sshll.u32 %s1, 4
      %s32 = int_to_ptr.hbm [resolvable:$true] %s31
      %s33 = sshll.u32 [#allocation6], 4
      %s34 = int_to_ptr.vmem [resolvable:$true] %s33
      %39 = dma.hbm_to_vmem [thread:$0]  %s32, 1024, %s34, [#allocation7], 64, 64, 4
    $region9: #{tpu_custom_call.1} parent=1 // pred_fallthru
      _
    // Predicated region
    $region10: #{tpu_custom_call.1} parent=1 // pred_check
      _
    $region11: #{tpu_custom_call.1} parent=1 // pred_check_branch
      %41 = sbr.rel (0) target = $region13
    $region12: #{tpu_custom_call.1} parent=1 // pred_region
      %43 = dma.done [#allocation4], 1024
    $region13: #{tpu_custom_call.1} parent=1 // pred_fallthru
      _
    // Predicated region
    $region14: #{tpu_custom_call.1} parent=1 // pred_check
      _
    $region15: #{tpu_custom_call.1} parent=1 // pred_check_branch
      %45 = sbr.rel (0) target = $region17
    $region16: #{tpu_custom_call.1} parent=1 // pred_region
      %47 = dma.done [#allocation7], 1024
    $region17: #{tpu_custom_call.1} parent=1 // pred_fallthru
      _
    %p48 = scmp.eq.s32.totalorder 0, 0
    // Predicated region
    $region18: #{tpu_custom_call.1} parent=1 // pred_check
      %p49 = pneg %p48
    $region19: #{tpu_custom_call.1} parent=1 // pred_check_branch
      %51 = sbr.rel (%p49) target = $region21
    $region20: #{tpu_custom_call.1} parent=1 // pred_region
      %52 = vst [vmem:[#allocation2] sm:$0xff] 0.0
      %53 = vst [vmem:[#allocation2 + $0x8] sm:$0xff] 0.0
      %54 = vst [vmem:[#allocation2 + $0x10] sm:$0xff] 0.0
      %55 = vst [vmem:[#allocation2 + $0x18] sm:$0xff] 0.0
      %56 = vst [vmem:[#allocation2 + $0x20] sm:$0xff] 0.0
      %57 = vst [vmem:[#allocation2 + $0x28] sm:$0xff] 0.0
      %58 = vst [vmem:[#allocation2 + $0x30] sm:$0xff] 0.0
      %59 = vst [vmem:[#allocation2 + $0x38] sm:$0xff] 0.0
      %60 = vst [vmem:[#allocation2 + $0x40] sm:$0xff] 0.0
      %61 = vst [vmem:[#allocation2 + $0x48] sm:$0xff] 0.0
      %62 = vst [vmem:[#allocation2 + $0x50] sm:$0xff] 0.0
      %63 = vst [vmem:[#allocation2 + $0x58] sm:$0xff] 0.0
      %64 = vst [vmem:[#allocation2 + $0x60] sm:$0xff] 0.0
      %65 = vst [vmem:[#allocation2 + $0x68] sm:$0xff] 0.0
      %66 = vst [vmem:[#allocation2 + $0x70] sm:$0xff] 0.0
      %67 = vst [vmem:[#allocation2 + $0x78] sm:$0xff] 0.0
    $region21: #{tpu_custom_call.1} parent=1 // pred_fallthru
      _
    %v68 = vld [vmem:[#allocation2] sm:$0xff]
    %v69 = vld [vmem:[#allocation2 + $0x8] sm:$0xff]
    %v70 = vld [vmem:[#allocation2 + $0x10] sm:$0xff]
    %v71 = vld [vmem:[#allocation2 + $0x18] sm:$0xff]
    %v72 = vld [vmem:[#allocation2 + $0x20] sm:$0xff]
    %v73 = vld [vmem:[#allocation2 + $0x28] sm:$0xff]
    %v74 = vld [vmem:[#allocation2 + $0x30] sm:$0xff]
    %v75 = vld [vmem:[#allocation2 + $0x38] sm:$0xff]
    %v76 = vld [vmem:[#allocation2 + $0x40] sm:$0xff]
    %v77 = vld [vmem:[#allocation2 + $0x48] sm:$0xff]
    %v78 = vld [vmem:[#allocation2 + $0x50] sm:$0xff]
    %v79 = vld [vmem:[#allocation2 + $0x58] sm:$0xff]
    %v80 = vld [vmem:[#allocation2 + $0x60] sm:$0xff]
    %v81 = vld [vmem:[#allocation2 + $0x68] sm:$0xff]
    %v82 = vld [vmem:[#allocation2 + $0x70] sm:$0xff]
    %v83 = vld [vmem:[#allocation2 + $0x78] sm:$0xff]
    %v84 = vld [vmem:[#allocation3] sm:$0xf]
    %v85 = vld [vmem:[#allocation3 + $0x4] sm:$0xf]
    %v86 = vld [vmem:[#allocation3 + $0x8] sm:$0xf]
    %v87 = vld [vmem:[#allocation3 + $0xc] sm:$0xf]
    %v88 = vld [vmem:[#allocation3 + $0x10] sm:$0xf]
    %v89 = vld [vmem:[#allocation3 + $0x14] sm:$0xf]
    %v90 = vld [vmem:[#allocation3 + $0x18] sm:$0xf]
    %v91 = vld [vmem:[#allocation3 + $0x1c] sm:$0xf]
    %v92 = vld [vmem:[#allocation3 + $0x20] sm:$0xf]
    %v93 = vld [vmem:[#allocation3 + $0x24] sm:$0xf]
    %v94 = vld [vmem:[#allocation3 + $0x28] sm:$0xf]
    %v95 = vld [vmem:[#allocation3 + $0x2c] sm:$0xf]
    %v96 = vld [vmem:[#allocation3 + $0x30] sm:$0xf]
    %v97 = vld [vmem:[#allocation3 + $0x34] sm:$0xf]
    %v98 = vld [vmem:[#allocation3 + $0x38] sm:$0xf]
    %v99 = vld [vmem:[#allocation3 + $0x3c] sm:$0xf]
    %v100 = vld [vmem:[#allocation6] sm:$0xf]
    %v101 = vld [vmem:[#allocation6 + $0x4] sm:$0xf]
    %v102 = vld [vmem:[#allocation6 + $0x8] sm:$0xf]
    %v103 = vld [vmem:[#allocation6 + $0xc] sm:$0xf]
    %v104 = vld [vmem:[#allocation6 + $0x10] sm:$0xf]
    %v105 = vld [vmem:[#allocation6 + $0x14] sm:$0xf]
    %v106 = vld [vmem:[#allocation6 + $0x18] sm:$0xf]
    %v107 = vld [vmem:[#allocation6 + $0x1c] sm:$0xf]
    %v108 = vld [vmem:[#allocation6 + $0x20] sm:$0xf]
    %v109 = vld [vmem:[#allocation6 + $0x24] sm:$0xf]
    %v110 = vld [vmem:[#allocation6 + $0x28] sm:$0xf]
    %v111 = vld [vmem:[#allocation6 + $0x2c] sm:$0xf]
    %v112 = vld [vmem:[#allocation6 + $0x30] sm:$0xf]
    %v113 = vld [vmem:[#allocation6 + $0x34] sm:$0xf]
    %v114 = vld [vmem:[#allocation6 + $0x38] sm:$0xf]
    %v115 = vld [vmem:[#allocation6 + $0x3c] sm:$0xf]
    %v132 = vunpack.c.l.b16 %v84
    %v133 = vunpack.c.l.b16 %v85
    %v134 = vunpack.c.l.b16 %v86
    %v135 = vunpack.c.l.b16 %v87
    %v136 = vunpack.c.l.b16 %v88
    %v137 = vunpack.c.l.b16 %v89
    %v138 = vunpack.c.l.b16 %v90
    %v139 = vunpack.c.l.b16 %v91
    %v140 = vunpack.c.l.b16 %v92
    %v141 = vunpack.c.l.b16 %v93
    %v142 = vunpack.c.l.b16 %v94
    %v143 = vunpack.c.l.b16 %v95
    %v144 = vunpack.c.l.b16 %v96
    %v145 = vunpack.c.l.b16 %v97
    %v146 = vunpack.c.l.b16 %v98
    %v147 = vunpack.c.l.b16 %v99
    %v148 = vpack.c.b16 %v133, %v132
    %v149 = vpack.c.b16 %v135, %v134
    %v150 = vpack.c.b16 %v137, %v136
    %v151 = vpack.c.b16 %v139, %v138
    %v152 = vpack.c.b16 %v141, %v140
    %v153 = vpack.c.b16 %v143, %v142
    %v154 = vpack.c.b16 %v145, %v144
    %v155 = vpack.c.b16 %v147, %v146
    %v180 = vunpack.c.l.b16 %v100
    %v181 = vunpack.c.l.b16 %v101
    %v182 = vunpack.c.l.b16 %v102
    %v183 = vunpack.c.l.b16 %v103
    %v184 = vunpack.c.l.b16 %v104
    %v185 = vunpack.c.l.b16 %v105
    %v186 = vunpack.c.l.b16 %v106
    %v187 = vunpack.c.l.b16 %v107
    %v188 = vunpack.c.l.b16 %v108
    %v189 = vunpack.c.l.b16 %v109
    %v190 = vunpack.c.l.b16 %v110
    %v191 = vunpack.c.l.b16 %v111
    %v192 = vunpack.c.l.b16 %v112
    %v193 = vunpack.c.l.b16 %v113
    %v194 = vunpack.c.l.b16 %v114
    %v195 = vunpack.c.l.b16 %v115
    %v196 = vpack.c.b16 %v181, %v180
    %v197 = vpack.c.b16 %v183, %v182
    %v198 = vpack.c.b16 %v185, %v184
    %v199 = vpack.c.b16 %v187, %v186
    %v200 = vpack.c.b16 %v189, %v188
    %v201 = vpack.c.b16 %v191, %v190
    %v202 = vpack.c.b16 %v193, %v192
    %v203 = vpack.c.b16 %v195, %v194
    %212 = vmatpush.bf16.msra.mxu0 %v203
    %213 = vmatpush.bf16.msra.mxu0 %v202
    %214 = vmatpush.bf16.msra.mxu0 %v201
    %215 = vmatpush.bf16.msra.mxu0 %v200
    %216 = vmatpush.bf16.msra.mxu0 %v199
    %217 = vmatpush.bf16.msra.mxu0 %v198
    %218 = vmatpush.bf16.msra.mxu0 %v197
    %219 = vmatpush.bf16.msra.mxu0 %v196
    %220 = vmatmul.bf16.gmra.mxu0 %v148
    %v221 = vpop.f32.mrf.mxu0
    %v222 = vadd.f32 0.0, %v221
    %v223 = vpop.f32.mrf.mxu0
    %v224 = vadd.f32 0.0, %v223
    %225 = vmatmul.bf16.gmra.mxu0 %v149
    %v226 = vpop.f32.mrf.mxu0
    %v227 = vadd.f32 0.0, %v226
    %v228 = vpop.f32.mrf.mxu0
    %v229 = vadd.f32 0.0, %v228
    %230 = vmatmul.bf16.gmra.mxu0 %v150
    %v231 = vpop.f32.mrf.mxu0
    %v232 = vadd.f32 0.0, %v231
    %v233 = vpop.f32.mrf.mxu0
    %v234 = vadd.f32 0.0, %v233
    %235 = vmatmul.bf16.gmra.mxu0 %v151
    %v236 = vpop.f32.mrf.mxu0
    %v237 = vadd.f32 0.0, %v236
    %v238 = vpop.f32.mrf.mxu0
    %v239 = vadd.f32 0.0, %v238
    %240 = vmatmul.bf16.gmra.mxu0 %v152
    %v241 = vpop.f32.mrf.mxu0
    %v242 = vadd.f32 0.0, %v241
    %v243 = vpop.f32.mrf.mxu0
    %v244 = vadd.f32 0.0, %v243
    %245 = vmatmul.bf16.gmra.mxu0 %v153
    %v246 = vpop.f32.mrf.mxu0
    %v247 = vadd.f32 0.0, %v246
    %v248 = vpop.f32.mrf.mxu0
    %v249 = vadd.f32 0.0, %v248
    %250 = vmatmul.bf16.gmra.mxu0 %v154
    %v251 = vpop.f32.mrf.mxu0
    %v252 = vadd.f32 0.0, %v251
    %v253 = vpop.f32.mrf.mxu0
    %v254 = vadd.f32 0.0, %v253
    %255 = vmatmul.bf16.gmra.mxu0 %v155
    %v256 = vpop.f32.mrf.mxu0
    %v257 = vadd.f32 0.0, %v256
    %v258 = vpop.f32.mrf.mxu0
    %v259 = vadd.f32 0.0, %v258
    %260 = vdwg.mxu0
    %v261 = vadd.f32 %v68, %v222
    %v262 = vadd.f32 %v69, %v224
    %v263 = vadd.f32 %v70, %v227
    %v264 = vadd.f32 %v71, %v229
    %v265 = vadd.f32 %v72, %v232
    %v266 = vadd.f32 %v73, %v234
    %v267 = vadd.f32 %v74, %v237
    %v268 = vadd.f32 %v75, %v239
    %v269 = vadd.f32 %v76, %v242
    %v270 = vadd.f32 %v77, %v244
    %v271 = vadd.f32 %v78, %v247
    %v272 = vadd.f32 %v79, %v249
    %v273 = vadd.f32 %v80, %v252
    %v274 = vadd.f32 %v81, %v254
    %v275 = vadd.f32 %v82, %v257
    %v276 = vadd.f32 %v83, %v259
    %277 = vst [vmem:[#allocation2] sm:$0xff] %v261
    %278 = vst [vmem:[#allocation2 + $0x8] sm:$0xff] %v262
    %279 = vst [vmem:[#allocation2 + $0x10] sm:$0xff] %v263
    %280 = vst [vmem:[#allocation2 + $0x18] sm:$0xff] %v264
    %281 = vst [vmem:[#allocation2 + $0x20] sm:$0xff] %v265
    %282 = vst [vmem:[#allocation2 + $0x28] sm:$0xff] %v266
    %283 = vst [vmem:[#allocation2 + $0x30] sm:$0xff] %v267
    %284 = vst [vmem:[#allocation2 + $0x38] sm:$0xff] %v268
    %285 = vst [vmem:[#allocation2 + $0x40] sm:$0xff] %v269
    %286 = vst [vmem:[#allocation2 + $0x48] sm:$0xff] %v270
    %287 = vst [vmem:[#allocation2 + $0x50] sm:$0xff] %v271
    %288 = vst [vmem:[#allocation2 + $0x58] sm:$0xff] %v272
    %289 = vst [vmem:[#allocation2 + $0x60] sm:$0xff] %v273
    %290 = vst [vmem:[#allocation2 + $0x68] sm:$0xff] %v274
    %291 = vst [vmem:[#allocation2 + $0x70] sm:$0xff] %v275
    %292 = vst [vmem:[#allocation2 + $0x78] sm:$0xff] %v276
    // Predicated region
    $region22: #{tpu_custom_call.1} parent=1 // pred_check
      %p293 = pneg %p48
    $region23: #{tpu_custom_call.1} parent=1 // pred_check_branch
      %295 = sbr.rel (%p293) target = $region25
    $region24: #{tpu_custom_call.1} parent=1 // pred_region
      %v296 = vld [vmem:[#allocation2] sm:$0xff]
      %v297 = vld [vmem:[#allocation2 + $0x8] sm:$0xff]
      %v298 = vld [vmem:[#allocation2 + $0x10] sm:$0xff]
      %v299 = vld [vmem:[#allocation2 + $0x18] sm:$0xff]
      %v300 = vld [vmem:[#allocation2 + $0x20] sm:$0xff]
      %v301 = vld [vmem:[#allocation2 + $0x28] sm:$0xff]
      %v302 = vld [vmem:[#allocation2 + $0x30] sm:$0xff]
      %v303 = vld [vmem:[#allocation2 + $0x38] sm:$0xff]
      %v304 = vld [vmem:[#allocation2 + $0x40] sm:$0xff]
      %v305 = vld [vmem:[#allocation2 + $0x48] sm:$0xff]
      %v306 = vld [vmem:[#allocation2 + $0x50] sm:$0xff]
      %v307 = vld [vmem:[#allocation2 + $0x58] sm:$0xff]
      %v308 = vld [vmem:[#allocation2 + $0x60] sm:$0xff]
      %v309 = vld [vmem:[#allocation2 + $0x68] sm:$0xff]
      %v310 = vld [vmem:[#allocation2 + $0x70] sm:$0xff]
      %v311 = vld [vmem:[#allocation2 + $0x78] sm:$0xff]
      %v312 = vpack.c.bf16 %v296, %v296
      %v313 = vpack.c.bf16 %v297, %v297
      %v314 = vpack.c.bf16 %v298, %v298
      %v315 = vpack.c.bf16 %v299, %v299
      %v316 = vpack.c.bf16 %v300, %v300
      %v317 = vpack.c.bf16 %v301, %v301
      %v318 = vpack.c.bf16 %v302, %v302
      %v319 = vpack.c.bf16 %v303, %v303
      %v320 = vpack.c.bf16 %v304, %v304
      %v321 = vpack.c.bf16 %v305, %v305
      %v322 = vpack.c.bf16 %v306, %v306
      %v323 = vpack.c.bf16 %v307, %v307
      %v324 = vpack.c.bf16 %v308, %v308
      %v325 = vpack.c.bf16 %v309, %v309
      %v326 = vpack.c.bf16 %v310, %v310
      %v327 = vpack.c.bf16 %v311, %v311
      %328 = vst [vmem:[#allocation8] sm:$0xf] %v312
      %329 = vst [vmem:[#allocation8 + $0x4] sm:$0xf] %v313
      %330 = vst [vmem:[#allocation8 + $0x8] sm:$0xf] %v314
      %331 = vst [vmem:[#allocation8 + $0xc] sm:$0xf] %v315
      %332 = vst [vmem:[#allocation8 + $0x10] sm:$0xf] %v316
      %333 = vst [vmem:[#allocation8 + $0x14] sm:$0xf] %v317
      %334 = vst [vmem:[#allocation8 + $0x18] sm:$0xf] %v318
      %335 = vst [vmem:[#allocation8 + $0x1c] sm:$0xf] %v319
      %336 = vst [vmem:[#allocation8 + $0x20] sm:$0xf] %v320
      %337 = vst [vmem:[#allocation8 + $0x24] sm:$0xf] %v321
      %338 = vst [vmem:[#allocation8 + $0x28] sm:$0xf] %v322
      %339 = vst [vmem:[#allocation8 + $0x2c] sm:$0xf] %v323
      %340 = vst [vmem:[#allocation8 + $0x30] sm:$0xf] %v324
      %341 = vst [vmem:[#allocation8 + $0x34] sm:$0xf] %v325
      %342 = vst [vmem:[#allocation8 + $0x38] sm:$0xf] %v326
      %343 = vst [vmem:[#allocation8 + $0x3c] sm:$0xf] %v327
      %v344 = vadd.f32 %v296, %v297
      %v345 = vadd.f32 %v344, %v298
      %v346 = vadd.f32 %v345, %v299
      %v347 = vadd.f32 %v346, %v300
      %v348 = vadd.f32 %v347, %v301
      %v349 = vadd.f32 %v348, %v302
      %v350 = vadd.f32 %v349, %v303
      %v351 = vadd.f32 %v350, %v304
      %v352 = vadd.f32 %v351, %v305
      %v353 = vadd.f32 %v352, %v306
      %v354 = vadd.f32 %v353, %v307
      %v355 = vadd.f32 %v354, %v308
      %v356 = vadd.f32 %v355, %v309
      %v357 = vadd.f32 %v356, %v310
      %v358 = vadd.f32 %v357, %v311
      %v359 = vrot.slane %v358, 4
      %v360 = vadd.f32 %v358, %v359
      %v361 = vrot.slane %v360, 2
      %v362 = vadd.f32 %v360, %v361
      %v363 = vrot.slane %v362, 1
      %v364 = vadd.f32 %v362, %v363
      %v365 = vmul.f32 %v296, %v296
      %v366 = vmul.f32 %v297, %v297
      %v367 = vmul.f32 %v298, %v298
      %v368 = vmul.f32 %v299, %v299
      %v369 = vmul.f32 %v300, %v300
      %v370 = vmul.f32 %v301, %v301
      %v371 = vmul.f32 %v302, %v302
      %v372 = vmul.f32 %v303, %v303
      %v373 = vmul.f32 %v304, %v304
      %v374 = vmul.f32 %v305, %v305
      %v375 = vmul.f32 %v306, %v306
      %v376 = vmul.f32 %v307, %v307
      %v377 = vmul.f32 %v308, %v308
      %v378 = vmul.f32 %v309, %v309
      %v379 = vmul.f32 %v310, %v310
      %v380 = vmul.f32 %v311, %v311
      %v381 = vadd.f32 %v365, %v366
      %v382 = vadd.f32 %v381, %v367
      %v383 = vadd.f32 %v382, %v368
      %v384 = vadd.f32 %v383, %v369
      %v385 = vadd.f32 %v384, %v370
      %v386 = vadd.f32 %v385, %v371
      %v387 = vadd.f32 %v386, %v372
      %v388 = vadd.f32 %v387, %v373
      %v389 = vadd.f32 %v388, %v374
      %v390 = vadd.f32 %v389, %v375
      %v391 = vadd.f32 %v390, %v376
      %v392 = vadd.f32 %v391, %v377
      %v393 = vadd.f32 %v392, %v378
      %v394 = vadd.f32 %v393, %v379
      %v395 = vadd.f32 %v394, %v380
      %v396 = vrot.slane %v395, 4
      %v397 = vadd.f32 %v395, %v396
      %v398 = vrot.slane %v397, 2
      %v399 = vadd.f32 %v397, %v398
      %v400 = vrot.slane %v399, 1
      %v401 = vadd.f32 %v399, %v400
      %402 = vst [vmem:[#allocation9] sm:$0xff] %v364
      %403 = vst [vmem:[#allocation11] sm:$0xff] %v401
    $region25: #{tpu_custom_call.1} parent=1 // pred_fallthru
      _
    // Predicated region
    $region26: #{tpu_custom_call.1} parent=1 // pred_check
      _
    $region27: #{tpu_custom_call.1} parent=1 // pred_check_branch
      %405 = sbr.rel (0) target = $region29
    $region28: #{tpu_custom_call.1} parent=1 // pred_region
      %407 = vsyncadd [#allocation5], 0
      %s408 = sshll.u32 [#allocation8], 4
      %s409 = int_to_ptr.vmem [resolvable:$true] %s408
      %s410 = sshll.u32 %s2, 4
      %s411 = int_to_ptr.hbm [resolvable:$true] %s410
      %416 = dma.vmem_to_hbm [thread:$0]  %s409, 1024, %s411, [#allocation5], 64, 64, 4
    $region29: #{tpu_custom_call.1} parent=1 // pred_fallthru
      _
    // Predicated region
    $region30: #{tpu_custom_call.1} parent=1 // pred_check
      _
    $region31: #{tpu_custom_call.1} parent=1 // pred_check_branch
      %418 = sbr.rel (0) target = $region33
    $region32: #{tpu_custom_call.1} parent=1 // pred_region
      %420 = vsyncadd [#allocation10], 0
      %s422 = sshll.u32 [#allocation9], 4
      %s423 = int_to_ptr.vmem [resolvable:$true] %s422
      %s424 = sshll.u32 %s3, 4
      %s425 = int_to_ptr.hbm [resolvable:$true] %s424
      %427 = dma.vmem_to_hbm [thread:$0]  %s423, 128, %s425, [#allocation10]
    $region33: #{tpu_custom_call.1} parent=1 // pred_fallthru
      _
    // Predicated region
    $region34: #{tpu_custom_call.1} parent=1 // pred_check
      _
    $region35: #{tpu_custom_call.1} parent=1 // pred_check_branch
      %429 = sbr.rel (0) target = $region37
    $region36: #{tpu_custom_call.1} parent=1 // pred_region
      %431 = vsyncadd [#allocation10], 0
      %s433 = sshll.u32 [#allocation11], 4
      %s434 = int_to_ptr.vmem [resolvable:$true] %s433
      %s435 = sshll.u32 %s4, 4
      %s436 = int_to_ptr.hbm [resolvable:$true] %s435
      %438 = dma.vmem_to_hbm [thread:$0]  %s434, 128, %s436, [#allocation10]
    $region37: #{tpu_custom_call.1} parent=1 // pred_fallthru
      _
    // Predicated region
    $region38: #{tpu_custom_call.1} parent=1 // pred_check
      _
    $region39: #{tpu_custom_call.1} parent=1 // pred_check_branch
      %440 = sbr.rel (0) target = $region41
    $region40: #{tpu_custom_call.1} parent=1 // pred_region
      %442 = dma.done [#allocation5], 1024
    $region41: #{tpu_custom_call.1} parent=1 // pred_fallthru
      _
    // Predicated region
    $region42: #{tpu_custom_call.1} parent=1 // pred_check
      _
    $region43: #{tpu_custom_call.1} parent=1 // pred_check_branch
      %444 = sbr.rel (0) target = $region45
    $region44: #{tpu_custom_call.1} parent=1 // pred_region
      %446 = dma.done [#allocation10], 128
    $region45: #{tpu_custom_call.1} parent=1 // pred_fallthru
      _
    // Predicated region
    $region46: #{tpu_custom_call.1} parent=1 // pred_check
      _
    $region47: #{tpu_custom_call.1} parent=1 // pred_check_branch
      %448 = sbr.rel (0) target = $region49
    $region48: #{tpu_custom_call.1} parent=1 // pred_region
      %450 = dma.done [#allocation10], 128
    $region49: #{tpu_custom_call.1} parent=1 // pred_fallthru
      _
    %451 = vsyncpa [#allocation4], 1
    %452 = vsyncpa [#allocation7], 1
    %453 = vsyncpa [#allocation5], 1
    %454 = vsyncpa [#allocation10], 1

</llo_original>
